<compile_context>
chip_gen: v7x
topology: tpu7x:2x2x1
jax: 0.10.0
libtpu: 0.0.40
codegen_flags: <defaults>
</compile_context>

<pallas_src>
import jax
import jax.numpy as jnp
from jax.experimental import pallas as pl
from jax.experimental.pallas import tpu as pltpu


def _round_up(x, m):
    return ((x + m - 1) // m) * m


def _vmem_capacity_bytes():
    """Per-core VMEM capacity; conservative 64 MiB fallback (v7x per-TC)."""
    try:
        info = pltpu.get_tpu_info()
        cap = getattr(info, "vmem_capacity_bytes", None)
        if cap:
            return int(min(int(cap), 128 * 1024 * 1024))
    except Exception:
        pass
    return 64 * 1024 * 1024


def _sparse_memory_kernel(x_ref, wp_ref, bp_ref, we_ref, be_ref, wd_ref, bd_ref,
                          dec_ref, enc_ref):
    # x tile streamed in its original f32; cast to bf16 on the VPU (free under
    # the MXU) right before the first matmul.
    x = x_ref[...].astype(jnp.bfloat16)

    # projected = relu(x @ Wp + bp)   -- MXU bf16 operands, f32 accumulate
    proj = jnp.dot(x, wp_ref[...], preferred_element_type=jnp.float32)
    proj = jnp.maximum(proj + bp_ref[...], 0.0)

    # encoded = relu(projected @ We + be)
    enc = jnp.dot(proj.astype(jnp.bfloat16), we_ref[...],
                  preferred_element_type=jnp.float32)
    enc = jnp.maximum(enc + be_ref[...], 0.0)

    # decoded = sigmoid(encoded @ Wd + bd)
    z = jnp.dot(enc.astype(jnp.bfloat16), wd_ref[...],
                preferred_element_type=jnp.float32)
    z = z + bd_ref[...]
    # sigmoid = 1 / (1 + exp(-z)); exp + approx reciprocal both land on the EUP
    # slot (idle while the MXU runs), keeping the divide off the f32 VALU.
    dec = pl.reciprocal(1.0 + jnp.exp(-z), approx=True)

    # NOTE: padded lanes of `dec` hold ~sigmoid(0)=0.5 (not 0); they are sliced
    # off in the wrapper and must never be consumed from the padded buffer.
    enc_ref[...] = enc.astype(enc_ref.dtype)
    dec_ref[...] = dec.astype(dec_ref.dtype)


def _select_tile_b(requested, b_p, x_itemsize, e_p, ev_p, c_p,
                   resident_bytes, vmem_cap):
    """Largest batch tile (multiple of 16) whose streaming+scratch footprint
    fits the per-core VMEM budget alongside the single-buffered weights."""
    per_row = (
        2 * x_itemsize * e_p      # x tile, double-buffered
        + 2 * e_p                 # in-kernel bf16 copy of x
        + (4 + 2 + 4) * ev_p      # proj f32 + proj bf16 + dec f32 (pre-store)
        + 2 * 2 * ev_p            # decoded bf16 out, double-buffered
        + (4 + 2) * c_p           # enc f32 + enc bf16
        + 2 * 2 * c_p             # encoded bf16 out, double-buffered
    )
    budget = int(0.75 * vmem_cap) - resident_bytes
    derived = 16
    if budget > per_row * 16:
        derived = (budget // per_row) // 16 * 16
    if requested is None:
        tile_b = min(derived, 512)        # diminishing returns past ~512 rows
    else:
        tile_b = min(max(16, (requested // 16) * 16), max(16, derived))
    tile_b = min(tile_b, b_p)             # never bigger than the (padded) batch
    return max(16, tile_b), per_row


def sparse_memory_text(x, wp, bp, we, be, wd, bd, *, tile_b=None):
    """Fused forward pass. Returns (decoded, encoded) in bfloat16."""
    batch, emb = x.shape
    event_size = wp.shape[1]
    compressed_size = we.shape[1]

    if x.dtype not in (jnp.float32, jnp.bfloat16):
        x = x.astype(jnp.float32)         # module does .float() first

    # Lane-pad feature dims to 128 only (no extra padding "for the MXU");
    # batch pads only to a multiple of 16 (bf16 output sublane packing).
    e_p = _round_up(emb, 128)
    ev_p = _round_up(event_size, 128)
    c_p = _round_up(compressed_size, 128)
    b_p = _round_up(batch, 16)

    # Avoid a wrapper-side copy of x when it is already aligned.
    if (b_p, e_p) != (batch, emb):
        x_p = jnp.pad(x, ((0, b_p - batch), (0, e_p - emb)))
    else:
        x_p = x

    def pad2(a, rows, cols, dtype):
        a = a.astype(dtype)
        if a.shape == (rows, cols):
            return a
        return jnp.pad(a, ((0, rows - a.shape[0]), (0, cols - a.shape[1])))

    # Resident weights in bf16 (single-buffered); biases stay f32.
    wp_p = pad2(wp, e_p, ev_p, jnp.bfloat16)
    we_p = pad2(we, ev_p, c_p, jnp.bfloat16)
    wd_p = pad2(wd, c_p, ev_p, jnp.bfloat16)
    bp_p = pad2(bp, 1, ev_p, jnp.float32)
    be_p = pad2(be, 1, c_p, jnp.float32)
    bd_p = pad2(bd, 1, ev_p, jnp.float32)

    resident_bytes = (2 * (wp_p.size + we_p.size + wd_p.size)
                      + 4 * (bp_p.size + be_p.size + bd_p.size))
    vmem_cap = _vmem_capacity_bytes()
    x_itemsize = jnp.dtype(x_p.dtype).itemsize
    tile_b, per_row = _select_tile_b(tile_b, b_p, x_itemsize, e_p, ev_p, c_p,
                                     resident_bytes, vmem_cap)

    grid_steps = pl.cdiv(b_p, tile_b)
    grid = (grid_steps,)

    # Explicit scoped-VMEM limit from the real footprint (+25% / +2 MiB slack),
    # never relying on the 16/32 MiB default.
    vmem_limit = resident_bytes + tile_b * per_row
    vmem_limit = min(vmem_cap, int(vmem_limit * 1.25) + (2 << 20))

    # Advisory cost hint (padded/ragged rows included in the compute estimate).
    rows_computed = grid_steps * tile_b
    flops = 2 * rows_computed * (e_p * ev_p + ev_p * c_p + c_p * ev_p)
    bytes_accessed = (x_p.size * x_itemsize
                      + 2 * (wp_p.size + we_p.size + wd_p.size)
                      + 4 * (bp_p.size + be_p.size + bd_p.size)
                      + 2 * b_p * (ev_p + c_p))          # bf16 outputs
    cost = pl.CostEstimate(flops=int(flops),
                           transcendentals=int(rows_computed * ev_p),  # sigmoid
                           bytes_accessed=int(bytes_accessed))

    def resident(shape):
        # Constant index_map -> fetched once; Buffered(1) -> no second buffer.
        return pl.BlockSpec(shape, lambda i: (0, 0),
                            pipeline_mode=pl.Buffered(1))

    dec_p, enc_p = pl.pallas_call(
        _sparse_memory_kernel,
        out_shape=(
            jax.ShapeDtypeStruct((b_p, ev_p), jnp.bfloat16),   # decoded (padded)
            jax.ShapeDtypeStruct((b_p, c_p), jnp.bfloat16),    # encoded (padded)
        ),
        grid=grid,
        in_specs=[
            pl.BlockSpec((tile_b, e_p), lambda i: (i, 0)),     # x: streamed
            resident((e_p, ev_p)), resident((1, ev_p)),        # projection W, b
            resident((ev_p, c_p)), resident((1, c_p)),         # encoder W, b
            resident((c_p, ev_p)), resident((1, ev_p)),        # decoder W, b
        ],
        out_specs=(
            pl.BlockSpec((tile_b, ev_p), lambda i: (i, 0)),
            pl.BlockSpec((tile_b, c_p), lambda i: (i, 0)),
        ),
        compiler_params=pltpu.CompilerParams(
            # Batch tiles are independent -> shard across v7x's 2 TensorCores.
            dimension_semantics=("parallel",),
            vmem_limit_bytes=int(vmem_limit),
        ),
        cost_estimate=cost,
    )(x_p, wp_p, bp_p, we_p, be_p, wd_p, bd_p)

    # Slice off padded batch rows / padded lanes (padded decoded lanes are 0.5).
    return dec_p[:batch, :event_size], enc_p[:batch, :compressed_size]


def init_params(key, embedding_dim, event_size, compressed_size):
    """PyTorch-style init: U(-1/sqrt(fan_in), 1/sqrt(fan_in)).
    Weights returned pre-transposed as (in_features, out_features)."""
    def linear(k, fan_in, fan_out):
        kw, kb = jax.random.split(k)
        bound = 1.0 / jnp.sqrt(fan_in)
        w = jax.random.uniform(kw, (fan_in, fan_out), jnp.float32, -bound, bound)
        b = jax.random.uniform(kb, (1, fan_out), jnp.float32, -bound, bound)
        return w, b

    k1, k2, k3 = jax.random.split(key, 3)
    wp, bp = linear(k1, embedding_dim, event_size)      # projection
    we, be = linear(k2, event_size, compressed_size)    # encoder
    wd, bd = linear(k3, compressed_size, event_size)    # decoder
    return wp, bp, we, be, wd, bd


def reference_forward(x, wp, bp, we, be, wd, bd):
    x = x.astype(jnp.float32)
    proj = jax.nn.relu(x @ wp + bp)
    enc = jax.nn.relu(proj @ we + be)
    dec = jax.nn.sigmoid(enc @ wd + bd)
    return dec, enc


if __name__ == "__main__":
    # Shapes consistent with the module's forward: text_embedding (batch, emb).
    # NOTE: at these toy shapes the kernel is launch/DMA-overhead bound; it is
    # meant for production event/compressed sizes (>= a few hundred).
    batch, embedding_dim, event_size, compressed_size = 8, 32, 64, 16

    key = jax.random.PRNGKey(0)
    k_x, k_p, k_x2 = jax.random.split(key, 3)
    x = jax.random.normal(k_x, (batch, embedding_dim), jnp.float32)
    params = init_params(k_p, embedding_dim, event_size, compressed_size)

    dec, enc = sparse_memory_text(x, *params)
    jax.block_until_ready((dec, enc))

    dec_ref, enc_ref = reference_forward(x, *params)
    assert dec.shape == (batch, event_size) and enc.shape == (batch, compressed_size)
    # bf16 MXU operands / bf16 outputs with f32 accumulation -> loose tolerance.
    assert jnp.allclose(dec.astype(jnp.float32), dec_ref, atol=3e-2, rtol=3e-2)
    assert jnp.allclose(enc.astype(jnp.float32), enc_ref, atol=3e-2, rtol=3e-2)

    # Second check: a ragged, multi-tile batch exercises the cdiv grid,
    # masked last tile, and minimal (x16) batch padding.
    batch2 = 300
    x2 = jax.random.normal(k_x2, (batch2, embedding_dim), jnp.float32)
    dec2, enc2 = sparse_memory_text(x2, *params, tile_b=128)
    jax.block_until_ready((dec2, enc2))
    dec2_ref, enc2_ref = reference_forward(x2, *params)
    assert dec2.shape == (batch2, event_size) and enc2.shape == (batch2, compressed_size)
    assert jnp.allclose(dec2.astype(jnp.float32), dec2_ref, atol=3e-2, rtol=3e-2)
    assert jnp.allclose(enc2.astype(jnp.float32), enc2_ref, atol=3e-2, rtol=3e-2)

    print("KERNEL_OK")
</pallas_src>

<mosaic_0001>
module attributes {stable_mosaic.version = 11 : i64} {
  func.func @_sparse_memory_kernel(%arg0: i32, %arg1: memref<16x128xf32, #tpu.memory_space<vmem>>, %arg2: memref<128x128xbf16, #tpu.memory_space<vmem>>, %arg3: memref<1x128xf32, #tpu.memory_space<vmem>>, %arg4: memref<128x128xbf16, #tpu.memory_space<vmem>>, %arg5: memref<1x128xf32, #tpu.memory_space<vmem>>, %arg6: memref<128x128xbf16, #tpu.memory_space<vmem>>, %arg7: memref<1x128xf32, #tpu.memory_space<vmem>>, %arg8: memref<16x128xbf16, #tpu.memory_space<vmem>>, %arg9: memref<16x128xbf16, #tpu.memory_space<vmem>>) attributes {dimension_semantics = [#tpu.dimension_semantics<parallel>], iteration_bounds = array<i64: 1>, scalar_prefetch = 0 : i64, scratch_operands = 0 : i64, tpu.core_type = #tpu.core_type<tc>, window_params = [{transform_indices = @transform_0, window_bounds = array<i64: 16, 128>}, {pipeline_mode = #tpu.pipeline_mode<synchronous>, transform_indices = @transform_1, window_bounds = array<i64: 128, 128>}, {pipeline_mode = #tpu.pipeline_mode<synchronous>, transform_indices = @transform_2, window_bounds = array<i64: 1, 128>}, {pipeline_mode = #tpu.pipeline_mode<synchronous>, transform_indices = @transform_3, window_bounds = array<i64: 128, 128>}, {pipeline_mode = #tpu.pipeline_mode<synchronous>, transform_indices = @transform_4, window_bounds = array<i64: 1, 128>}, {pipeline_mode = #tpu.pipeline_mode<synchronous>, transform_indices = @transform_5, window_bounds = array<i64: 128, 128>}, {pipeline_mode = #tpu.pipeline_mode<synchronous>, transform_indices = @transform_6, window_bounds = array<i64: 1, 128>}, {transform_indices = @transform_7, window_bounds = array<i64: 16, 128>}, {transform_indices = @transform_8, window_bounds = array<i64: 16, 128>}]} {
    %c0 = arith.constant 0 : index
    %c0_0 = arith.constant 0 : index
    %0 = vector.load %arg1[%c0, %c0_0] : memref<16x128xf32, #tpu.memory_space<vmem>>, vector<16x128xf32>
    %1 = arith.truncf %0 : vector<16x128xf32> to vector<16x128xbf16>
    %c0_1 = arith.constant 0 : index
    %c0_2 = arith.constant 0 : index
    %2 = vector.load %arg2[%c0_1, %c0_2] : memref<128x128xbf16, #tpu.memory_space<vmem>>, vector<128x128xbf16>
    %cst = arith.constant dense<0.000000e+00> : vector<16x128xf32>
    %3 = tpu.matmul %1, %2, %cst {dimension_numbers = #tpu.dot_dimension_numbers<[1], [0], [0], [1], [0, 0, 1, 1], [], []>} : vector<16x128xbf16>, vector<128x128xbf16>, vector<16x128xf32> -> vector<16x128xf32>
    %c0_3 = arith.constant 0 : index
    %c0_4 = arith.constant 0 : index
    %4 = vector.load %arg3[%c0_3, %c0_4] : memref<1x128xf32, #tpu.memory_space<vmem>>, vector<1x128xf32>
    %5 = vector.broadcast %4 : vector<1x128xf32> to vector<16x128xf32>
    %6 = arith.addf %3, %5 : vector<16x128xf32>
    %cst_5 = arith.constant 0.000000e+00 : f32
    %7 = vector.broadcast %cst_5 : f32 to vector<16x128xf32>
    %8 = arith.maximumf %6, %7 : vector<16x128xf32>
    %9 = arith.truncf %8 : vector<16x128xf32> to vector<16x128xbf16>
    %c0_6 = arith.constant 0 : index
    %c0_7 = arith.constant 0 : index
    %10 = vector.load %arg4[%c0_6, %c0_7] : memref<128x128xbf16, #tpu.memory_space<vmem>>, vector<128x128xbf16>
    %cst_8 = arith.constant dense<0.000000e+00> : vector<16x128xf32>
    %11 = tpu.matmul %9, %10, %cst_8 {dimension_numbers = #tpu.dot_dimension_numbers<[1], [0], [0], [1], [0, 0, 1, 1], [], []>} : vector<16x128xbf16>, vector<128x128xbf16>, vector<16x128xf32> -> vector<16x128xf32>
    %c0_9 = arith.constant 0 : index
    %c0_10 = arith.constant 0 : index
    %12 = vector.load %arg5[%c0_9, %c0_10] : memref<1x128xf32, #tpu.memory_space<vmem>>, vector<1x128xf32>
    %13 = vector.broadcast %12 : vector<1x128xf32> to vector<16x128xf32>
    %14 = arith.addf %11, %13 : vector<16x128xf32>
    %cst_11 = arith.constant 0.000000e+00 : f32
    %15 = vector.broadcast %cst_11 : f32 to vector<16x128xf32>
    %16 = arith.maximumf %14, %15 : vector<16x128xf32>
    %17 = arith.truncf %16 : vector<16x128xf32> to vector<16x128xbf16>
    %c0_12 = arith.constant 0 : index
    %c0_13 = arith.constant 0 : index
    %18 = vector.load %arg6[%c0_12, %c0_13] : memref<128x128xbf16, #tpu.memory_space<vmem>>, vector<128x128xbf16>
    %cst_14 = arith.constant dense<0.000000e+00> : vector<16x128xf32>
    %19 = tpu.matmul %17, %18, %cst_14 {dimension_numbers = #tpu.dot_dimension_numbers<[1], [0], [0], [1], [0, 0, 1, 1], [], []>} : vector<16x128xbf16>, vector<128x128xbf16>, vector<16x128xf32> -> vector<16x128xf32>
    %c0_15 = arith.constant 0 : index
    %c0_16 = arith.constant 0 : index
    %20 = vector.load %arg7[%c0_15, %c0_16] : memref<1x128xf32, #tpu.memory_space<vmem>>, vector<1x128xf32>
    %21 = vector.broadcast %20 : vector<1x128xf32> to vector<16x128xf32>
    %22 = arith.addf %19, %21 : vector<16x128xf32>
    %cst_17 = arith.constant 0.000000e+00 : f32
    %23 = vector.broadcast %cst_17 : f32 to vector<16x128xf32>
    %24 = arith.subf %23, %22 : vector<16x128xf32>
    %25 = math.exp %24 : vector<16x128xf32>
    %cst_18 = arith.constant 1.000000e+00 : f32
    %26 = vector.broadcast %cst_18 : f32 to vector<16x128xf32>
    %27 = arith.addf %26, %25 : vector<16x128xf32>
    %28 = tpu.reciprocal %27 {approx = true} : vector<16x128xf32> -> vector<16x128xf32>
    %29 = arith.truncf %16 : vector<16x128xf32> to vector<16x128xbf16>
    %c0_19 = arith.constant 0 : index
    %c0_20 = arith.constant 0 : index
    %30 = vector.load %arg9[%c0_19, %c0_20] : memref<16x128xbf16, #tpu.memory_space<vmem>>, vector<16x128xbf16>
    tpu.vector_store %arg9[%c0_19, %c0_20], %29 {strides = array<i32>} : memref<16x128xbf16, #tpu.memory_space<vmem>>, vector<16x128xbf16>,
    %31 = arith.truncf %28 : vector<16x128xf32> to vector<16x128xbf16>
    %c0_21 = arith.constant 0 : index
    %c0_22 = arith.constant 0 : index
    %32 = vector.load %arg8[%c0_21, %c0_22] : memref<16x128xbf16, #tpu.memory_space<vmem>>, vector<16x128xbf16>
    tpu.vector_store %arg8[%c0_21, %c0_22], %31 {strides = array<i32>} : memref<16x128xbf16, #tpu.memory_space<vmem>>, vector<16x128xbf16>,
    return
  }
  func.func @transform_0(%arg0: i32) -> (i32, i32) {
    %c0_i32 = arith.constant 0 : i32
    %c0_i32_0 = arith.constant 0 : i32
    return %arg0, %c0_i32 : i32, i32
  }
  func.func @transform_1(%arg0: i32) -> (i32, i32) {
    %c0_i32 = arith.constant 0 : i32
    %c0_i32_0 = arith.constant 0 : i32
    %c0_i32_1 = arith.constant 0 : i32
    return %c0_i32, %c0_i32_0 : i32, i32
  }
  func.func @transform_2(%arg0: i32) -> (i32, i32) {
    %c0_i32 = arith.constant 0 : i32
    %c0_i32_0 = arith.constant 0 : i32
    %c0_i32_1 = arith.constant 0 : i32
    return %c0_i32, %c0_i32_0 : i32, i32
  }
  func.func @transform_3(%arg0: i32) -> (i32, i32) {
    %c0_i32 = arith.constant 0 : i32
    %c0_i32_0 = arith.constant 0 : i32
    %c0_i32_1 = arith.constant 0 : i32
    return %c0_i32, %c0_i32_0 : i32, i32
  }
  func.func @transform_4(%arg0: i32) -> (i32, i32) {
    %c0_i32 = arith.constant 0 : i32
    %c0_i32_0 = arith.constant 0 : i32
    %c0_i32_1 = arith.constant 0 : i32
    return %c0_i32, %c0_i32_0 : i32, i32
  }
  func.func @transform_5(%arg0: i32) -> (i32, i32) {
    %c0_i32 = arith.constant 0 : i32
    %c0_i32_0 = arith.constant 0 : i32
    %c0_i32_1 = arith.constant 0 : i32
    return %c0_i32, %c0_i32_0 : i32, i32
  }
  func.func @transform_6(%arg0: i32) -> (i32, i32) {
    %c0_i32 = arith.constant 0 : i32
    %c0_i32_0 = arith.constant 0 : i32
    %c0_i32_1 = arith.constant 0 : i32
    return %c0_i32, %c0_i32_0 : i32, i32
  }
  func.func @transform_7(%arg0: i32) -> (i32, i32) {
    %c0_i32 = arith.constant 0 : i32
    %c0_i32_0 = arith.constant 0 : i32
    return %arg0, %c0_i32 : i32, i32
  }
  func.func @transform_8(%arg0: i32) -> (i32, i32) {
    %c0_i32 = arith.constant 0 : i32
    %c0_i32_0 = arith.constant 0 : i32
    return %arg0, %c0_i32 : i32, i32
  }
}

</mosaic_0001>

<llo_original>
// kernel: tpu_custom_call.1
$region0: #{tpu_custom_call.1}
  #allocation0 [shape = 'u32[]', space=smem, size = 0x4, offset = 0x4, fixed_abs, tag = 'smem constant byte address 0x4 - core index']
  #allocation1 [shape = 'u32[144,128]{1,0:T(1,128)}', space=vmem, size = 0x12000, scoped, tag = 'internal scratch']
  %s0 = inlined_call_operand.hbm [shape: f32[16,128], index: 0, kind: input, shape index: {}]
  %s1 = inlined_call_operand.hbm [shape: bf16[128,128], index: 1, kind: input, shape index: {}]
  %s2 = inlined_call_operand.vmem [shape: f32[1,128], index: 2, kind: input, shape index: {}]
  %s3 = inlined_call_operand.hbm [shape: bf16[128,128], index: 3, kind: input, shape index: {}]
  %s4 = inlined_call_operand.vmem [shape: f32[1,128], index: 4, kind: input, shape index: {}]
  %s5 = inlined_call_operand.hbm [shape: bf16[128,128], index: 5, kind: input, shape index: {}]
  %s6 = inlined_call_operand.vmem [shape: f32[1,128], index: 6, kind: input, shape index: {}]
  %s7 = inlined_call_operand.hbm [shape: bf16[16,128], index: 7, kind: output, shape index: {0}]
  %s8 = inlined_call_operand.hbm [shape: bf16[16,128], index: 8, kind: output, shape index: {1}]
  %9 = xla_tuple %s7, %s8
  %s10 = sld [smem:[#allocation0]]
  $region62: #{tpu_custom_call.1} parent=0
    _
  %s12 = ssub.s32 1, %s10
  %s13 = scalar_select 0, %s12, %s10
  $region1: #{tpu_custom_call.1} parent=0
    #allocation2 [shape = 'u8[8192]{0}', space=vmem, size = 0x2000, scoped, tag = 'input window, operand 0, single buffered']
    #allocation3 [shape = 's32[1]{0}', space=sflag, size = 0x4, scoped, tag = 'scoped memory for tpu_custom_call.1']
    #allocation4 [shape = 's32[1]{0}', space=sflag, size = 0x4, scoped, tag = 'scoped memory for tpu_custom_call.1']
    #allocation5 [shape = 'u8[32768]{0}', space=vmem, size = 0x8000, scoped, tag = 'input window, operand 1, single buffered']
    #allocation6 [shape = 's32[1]{0}', space=sflag, size = 0x4, scoped, tag = 'scoped memory for tpu_custom_call.1']
    #allocation7 [shape = 'u8[32768]{0}', space=vmem, size = 0x8000, scoped, tag = 'input window, operand 3, single buffered']
    #allocation8 [shape = 'u8[32768]{0}', space=vmem, size = 0x8000, scoped, tag = 'input window, operand 5, single buffered']
    #allocation9 [shape = 's32[1]{0}', space=sflag, size = 0x4, scoped, tag = 'scoped memory for tpu_custom_call.1']
    #allocation10 [shape = 'u8[4096]{0}', space=vmem, size = 0x1000, scoped, tag = 'output window, operand 0, single buffered']
    #allocation11 [shape = 'u8[4096]{0}', space=vmem, size = 0x1000, scoped, tag = 'output window, operand 1, single buffered']
    #allocation12 [shape = 's32[1]{0}', space=sflag, size = 0x4, scoped, tag = 'scoped memory for tpu_custom_call.1']
    %14 = vsyncpa [#allocation3], 0
    %15 = vsyncpa [#allocation6], 0
    %16 = vsyncpa [#allocation9], 0
    %17 = vsyncpa [#allocation4], 0
    %18 = vsyncpa [#allocation12], 0
    // Predicated region
    $region2: #{tpu_custom_call.1} parent=1 // pred_check
      _
    $region3: #{tpu_custom_call.1} parent=1 // pred_check_branch
      %20 = sbr.rel (0) target = $region5
    $region4: #{tpu_custom_call.1} parent=1 // pred_region
      %s22 = ssub.s32 256, 256
      %23 = vsyncadd [#allocation3], %s22
      %s24 = sshll.u32 [#allocation2], 4
      %s25 = int_to_ptr.vmem [resolvable:$true] %s24
      %30 = dma.hbm_to_vmem [thread:$0]  %s0, 256, %s25, [#allocation3], 128, 128, 8
    $region5: #{tpu_custom_call.1} parent=1 // pred_fallthru
      _
    // Predicated region
    $region6: #{tpu_custom_call.1} parent=1 // pred_check
      _
    $region7: #{tpu_custom_call.1} parent=1 // pred_check_branch
      %32 = sbr.rel (0) target = $region9
    $region8: #{tpu_custom_call.1} parent=1 // pred_region
      %s34 = ssub.s32 1024, 1024
      %35 = vsyncadd [#allocation6], %s34
      %s36 = sshll.u32 [#allocation5], 4
      %s37 = int_to_ptr.vmem [resolvable:$true] %s36
      %42 = dma.hbm_to_vmem [thread:$0]  %s1, 1024, %s37, [#allocation6], 64, 64, 4
    $region9: #{tpu_custom_call.1} parent=1 // pred_fallthru
      _
    // Predicated region
    $region10: #{tpu_custom_call.1} parent=1 // pred_check
      _
    $region11: #{tpu_custom_call.1} parent=1 // pred_check_branch
      %44 = sbr.rel (0) target = $region13
    $region12: #{tpu_custom_call.1} parent=1 // pred_region
      _
    $region13: #{tpu_custom_call.1} parent=1 // pred_fallthru
      _
    // Predicated region
    $region14: #{tpu_custom_call.1} parent=1 // pred_check
      _
    $region15: #{tpu_custom_call.1} parent=1 // pred_check_branch
      %46 = sbr.rel (0) target = $region17
    $region16: #{tpu_custom_call.1} parent=1 // pred_region
      %s48 = ssub.s32 1024, 1024
      %49 = vsyncadd [#allocation6], %s48
      %s50 = sshll.u32 [#allocation7], 4
      %s51 = int_to_ptr.vmem [resolvable:$true] %s50
      %56 = dma.hbm_to_vmem [thread:$0]  %s3, 1024, %s51, [#allocation6], 64, 64, 4
    $region17: #{tpu_custom_call.1} parent=1 // pred_fallthru
      _
    // Predicated region
    $region18: #{tpu_custom_call.1} parent=1 // pred_check
      _
    $region19: #{tpu_custom_call.1} parent=1 // pred_check_branch
      %58 = sbr.rel (0) target = $region21
    $region20: #{tpu_custom_call.1} parent=1 // pred_region
      _
    $region21: #{tpu_custom_call.1} parent=1 // pred_fallthru
      _
    // Predicated region
    $region22: #{tpu_custom_call.1} parent=1 // pred_check
      _
    $region23: #{tpu_custom_call.1} parent=1 // pred_check_branch
      %60 = sbr.rel (0) target = $region25
    $region24: #{tpu_custom_call.1} parent=1 // pred_region
      %s62 = ssub.s32 1024, 1024
      %63 = vsyncadd [#allocation9], %s62
      %s64 = sshll.u32 [#allocation8], 4
      %s65 = int_to_ptr.vmem [resolvable:$true] %s64
      %70 = dma.hbm_to_vmem [thread:$0]  %s5, 1024, %s65, [#allocation9], 64, 64, 4
    $region25: #{tpu_custom_call.1} parent=1 // pred_fallthru
      _
    // Predicated region
    $region26: #{tpu_custom_call.1} parent=1 // pred_check
      _
    $region27: #{tpu_custom_call.1} parent=1 // pred_check_branch
      %72 = sbr.rel (0) target = $region29
    $region28: #{tpu_custom_call.1} parent=1 // pred_region
      _
    $region29: #{tpu_custom_call.1} parent=1 // pred_fallthru
      _
    // Predicated region
    $region30: #{tpu_custom_call.1} parent=1 // pred_check
      _
    $region31: #{tpu_custom_call.1} parent=1 // pred_check_branch
      %74 = sbr.rel (0) target = $region33
    $region32: #{tpu_custom_call.1} parent=1 // pred_region
      %75 = dma.done [#allocation3], 256
    $region33: #{tpu_custom_call.1} parent=1 // pred_fallthru
      _
    // Predicated region
    $region34: #{tpu_custom_call.1} parent=1 // pred_check
      _
    $region35: #{tpu_custom_call.1} parent=1 // pred_check_branch
      %77 = sbr.rel (0) target = $region37
    $region36: #{tpu_custom_call.1} parent=1 // pred_region
      %78 = dma.done [#allocation6], 1024
    $region37: #{tpu_custom_call.1} parent=1 // pred_fallthru
      _
    // Predicated region
    $region38: #{tpu_custom_call.1} parent=1 // pred_check
      _
    $region39: #{tpu_custom_call.1} parent=1 // pred_check_branch
      %80 = sbr.rel (0) target = $region41
    $region40: #{tpu_custom_call.1} parent=1 // pred_region
      %81 = dma.done [#allocation6], 1024
    $region41: #{tpu_custom_call.1} parent=1 // pred_fallthru
      _
    // Predicated region
    $region42: #{tpu_custom_call.1} parent=1 // pred_check
      _
    $region43: #{tpu_custom_call.1} parent=1 // pred_check_branch
      %83 = sbr.rel (0) target = $region45
    $region44: #{tpu_custom_call.1} parent=1 // pred_region
      %84 = dma.done [#allocation9], 1024
    $region45: #{tpu_custom_call.1} parent=1 // pred_fallthru
      _
    %v86 = vld [vmem:[#allocation2] sm:$0xff]
    %v87 = vld [vmem:[#allocation2 + $0x8] sm:$0xff]
    %v88 = vpack.c.bf16 %v87, %v86
    %v89 = vld [vmem:[#allocation5] sm:$0xf]
    %v90 = vld [vmem:[#allocation5 + $0x4] sm:$0xf]
    %v91 = vld [vmem:[#allocation5 + $0x8] sm:$0xf]
    %v92 = vld [vmem:[#allocation5 + $0xc] sm:$0xf]
    %v93 = vld [vmem:[#allocation5 + $0x10] sm:$0xf]
    %v94 = vld [vmem:[#allocation5 + $0x14] sm:$0xf]
    %v95 = vld [vmem:[#allocation5 + $0x18] sm:$0xf]
    %v96 = vld [vmem:[#allocation5 + $0x1c] sm:$0xf]
    %v97 = vld [vmem:[#allocation5 + $0x20] sm:$0xf]
    %v98 = vld [vmem:[#allocation5 + $0x24] sm:$0xf]
    %v99 = vld [vmem:[#allocation5 + $0x28] sm:$0xf]
    %v100 = vld [vmem:[#allocation5 + $0x2c] sm:$0xf]
    %v101 = vld [vmem:[#allocation5 + $0x30] sm:$0xf]
    %v102 = vld [vmem:[#allocation5 + $0x34] sm:$0xf]
    %v103 = vld [vmem:[#allocation5 + $0x38] sm:$0xf]
    %v104 = vld [vmem:[#allocation5 + $0x3c] sm:$0xf]
    %v105 = vld [vmem:[%s2] sm:$0x1]
    %v107 = vlaneseq
    %v108 = vshrl.u32 %v107, 7
    %v109 = vsub.s32 0, %v108
    %v110 = vrot.slane %v105, %v109
    %v128 = vunpack.c.l.b16 %v89
    %v129 = vunpack.c.l.b16 %v90
    %v130 = vunpack.c.l.b16 %v91
    %v131 = vunpack.c.l.b16 %v92
    %v132 = vunpack.c.l.b16 %v93
    %v133 = vunpack.c.l.b16 %v94
    %v134 = vunpack.c.l.b16 %v95
    %v135 = vunpack.c.l.b16 %v96
    %v136 = vunpack.c.l.b16 %v97
    %v137 = vunpack.c.l.b16 %v98
    %v138 = vunpack.c.l.b16 %v99
    %v139 = vunpack.c.l.b16 %v100
    %v140 = vunpack.c.l.b16 %v101
    %v141 = vunpack.c.l.b16 %v102
    %v142 = vunpack.c.l.b16 %v103
    %v143 = vunpack.c.l.b16 %v104
    %v144 = vpack.c.b16 %v129, %v128
    %v145 = vpack.c.b16 %v131, %v130
    %v146 = vpack.c.b16 %v133, %v132
    %v147 = vpack.c.b16 %v135, %v134
    %v148 = vpack.c.b16 %v137, %v136
    %v149 = vpack.c.b16 %v139, %v138
    %v150 = vpack.c.b16 %v141, %v140
    %v151 = vpack.c.b16 %v143, %v142
    %160 = vmatprep.subr.bf16.mxu0 0
    %161 = vmatpush1.bf16.msra.mxu0 %v144
    %162 = vmatprep.subr.bf16.mxu0 0
    %163 = vmatpush1.bf16.msra.mxu0 %v145
    %164 = vmatprep.subr.bf16.mxu0 0
    %165 = vmatpush1.bf16.msra.mxu0 %v146
    %166 = vmatprep.subr.bf16.mxu0 0
    %167 = vmatpush1.bf16.msra.mxu0 %v147
    %168 = vmatprep.subr.bf16.mxu0 0
    %169 = vmatpush1.bf16.msra.mxu0 %v148
    %170 = vmatprep.subr.bf16.mxu0 0
    %171 = vmatpush1.bf16.msra.mxu0 %v149
    %172 = vmatprep.subr.bf16.mxu0 0
    %173 = vmatpush1.bf16.msra.mxu0 %v150
    %174 = vmatprep.subr.bf16.mxu0 0
    %175 = vmatpush1.bf16.msra.mxu0 %v151
    %176 = vmatprep.subr.bf16.mxu0 0
    %177 = vmatpush1.bf16.msra.mxu0 0
    %178 = vmatprep.subr.bf16.mxu0 0
    %179 = vmatpush1.bf16.msra.mxu0 0
    %180 = vmatprep.subr.bf16.mxu0 0
    %181 = vmatpush1.bf16.msra.mxu0 0
    %182 = vmatprep.subr.bf16.mxu0 0
    %183 = vmatpush1.bf16.msra.mxu0 0
    %184 = vmatprep.subr.bf16.mxu0 0
    %185 = vmatpush1.bf16.msra.mxu0 0
    %186 = vmatprep.subr.bf16.mxu0 0
    %187 = vmatpush1.bf16.msra.mxu0 0
    %188 = vmatprep.subr.bf16.mxu0 0
    %189 = vmatpush1.bf16.msra.mxu0 0
    %190 = vmatprep.subr.bf16.mxu0 0
    %191 = vmatpush1.bf16.msra.mxu0 0
    %192 = vmatprep.mubr.bf16.mxu0 0
    %193 = vmatmul.mubr.bf16.gmra.mrb[0].mxu0 %v88
    %v194 = vpop.f32.mrb[0].mxu0
    %v195 = vadd.f32 %v110, %v194
    %v196 = vpop.f32.mrb[0].mxu0
    %v197 = vpop.f32.mrb[0].mxu0
    %v198 = vadd.f32 %v110, %v197
    %v199 = vpop.f32.mrb[0].mxu0
    %200 = vdwg.mxu0
    %v201 = vmax.f32 %v195, 0.0
    %v202 = vmax.f32 %v198, 0.0
    %v203 = vpack.c.bf16 %v202, %v201
    %v204 = vld [vmem:[#allocation7] sm:$0xf]
    %v205 = vld [vmem:[#allocation7 + $0x4] sm:$0xf]
    %v206 = vld [vmem:[#allocation7 + $0x8] sm:$0xf]
    %v207 = vld [vmem:[#allocation7 + $0xc] sm:$0xf]
    %v208 = vld [vmem:[#allocation7 + $0x10] sm:$0xf]
    %v209 = vld [vmem:[#allocation7 + $0x14] sm:$0xf]
    %v210 = vld [vmem:[#allocation7 + $0x18] sm:$0xf]
    %v211 = vld [vmem:[#allocation7 + $0x1c] sm:$0xf]
    %v212 = vld [vmem:[#allocation7 + $0x20] sm:$0xf]
    %v213 = vld [vmem:[#allocation7 + $0x24] sm:$0xf]
    %v214 = vld [vmem:[#allocation7 + $0x28] sm:$0xf]
    %v215 = vld [vmem:[#allocation7 + $0x2c] sm:$0xf]
    %v216 = vld [vmem:[#allocation7 + $0x30] sm:$0xf]
    %v217 = vld [vmem:[#allocation7 + $0x34] sm:$0xf]
    %v218 = vld [vmem:[#allocation7 + $0x38] sm:$0xf]
    %v219 = vld [vmem:[#allocation7 + $0x3c] sm:$0xf]
    %v220 = vld [vmem:[%s4] sm:$0x1]
    %v222 = vlaneseq
    %v223 = vshrl.u32 %v222, 7
    %v224 = vsub.s32 0, %v223
    %v225 = vrot.slane %v220, %v224
    %v243 = vunpack.c.l.b16 %v204
    %v244 = vunpack.c.l.b16 %v205
    %v245 = vunpack.c.l.b16 %v206
    %v246 = vunpack.c.l.b16 %v207
    %v247 = vunpack.c.l.b16 %v208
    %v248 = vunpack.c.l.b16 %v209
    %v249 = vunpack.c.l.b16 %v210
    %v250 = vunpack.c.l.b16 %v211
    %v251 = vunpack.c.l.b16 %v212
    %v252 = vunpack.c.l.b16 %v213
    %v253 = vunpack.c.l.b16 %v214
    %v254 = vunpack.c.l.b16 %v215
    %v255 = vunpack.c.l.b16 %v216
    %v256 = vunpack.c.l.b16 %v217
    %v257 = vunpack.c.l.b16 %v218
    %v258 = vunpack.c.l.b16 %v219
    %v259 = vpack.c.b16 %v244, %v243
    %v260 = vpack.c.b16 %v246, %v245
    %v261 = vpack.c.b16 %v248, %v247
    %v262 = vpack.c.b16 %v250, %v249
    %v263 = vpack.c.b16 %v252, %v251
    %v264 = vpack.c.b16 %v254, %v253
    %v265 = vpack.c.b16 %v256, %v255
    %v266 = vpack.c.b16 %v258, %v257
    %275 = vmatprep.subr.bf16.mxu0 0
    %276 = vmatpush1.bf16.msra.mxu0 %v259
    %277 = vmatprep.subr.bf16.mxu0 0
    %278 = vmatpush1.bf16.msra.mxu0 %v260
    %279 = vmatprep.subr.bf16.mxu0 0
    %280 = vmatpush1.bf16.msra.mxu0 %v261
    %281 = vmatprep.subr.bf16.mxu0 0
    %282 = vmatpush1.bf16.msra.mxu0 %v262
    %283 = vmatprep.subr.bf16.mxu0 0
    %284 = vmatpush1.bf16.msra.mxu0 %v263
    %285 = vmatprep.subr.bf16.mxu0 0
    %286 = vmatpush1.bf16.msra.mxu0 %v264
    %287 = vmatprep.subr.bf16.mxu0 0
    %288 = vmatpush1.bf16.msra.mxu0 %v265
    %289 = vmatprep.subr.bf16.mxu0 0
    %290 = vmatpush1.bf16.msra.mxu0 %v266
    %291 = vmatprep.subr.bf16.mxu0 0
    %292 = vmatpush1.bf16.msra.mxu0 0
    %293 = vmatprep.subr.bf16.mxu0 0
    %294 = vmatpush1.bf16.msra.mxu0 0
    %295 = vmatprep.subr.bf16.mxu0 0
    %296 = vmatpush1.bf16.msra.mxu0 0
    %297 = vmatprep.subr.bf16.mxu0 0
    %298 = vmatpush1.bf16.msra.mxu0 0
    %299 = vmatprep.subr.bf16.mxu0 0
    %300 = vmatpush1.bf16.msra.mxu0 0
    %301 = vmatprep.subr.bf16.mxu0 0
    %302 = vmatpush1.bf16.msra.mxu0 0
    %303 = vmatprep.subr.bf16.mxu0 0
    %304 = vmatpush1.bf16.msra.mxu0 0
    %305 = vmatprep.subr.bf16.mxu0 0
    %306 = vmatpush1.bf16.msra.mxu0 0
    %307 = vmatprep.mubr.bf16.mxu0 0
    %308 = vmatmul.mubr.bf16.gmra.mrb[0].mxu0 %v203
    %v309 = vpop.f32.mrb[0].mxu0
    %v310 = vadd.f32 %v225, %v309
    %v311 = vpop.f32.mrb[0].mxu0
    %v312 = vpop.f32.mrb[0].mxu0
    %v313 = vadd.f32 %v225, %v312
    %v314 = vpop.f32.mrb[0].mxu0
    %315 = vdwg.mxu0
    %v316 = vmax.f32 %v310, 0.0
    %v317 = vmax.f32 %v313, 0.0
    %v318 = vpack.c.bf16 %v317, %v316
    %v319 = vld [vmem:[#allocation8] sm:$0xf]
    %v320 = vld [vmem:[#allocation8 + $0x4] sm:$0xf]
    %v321 = vld [vmem:[#allocation8 + $0x8] sm:$0xf]
    %v322 = vld [vmem:[#allocation8 + $0xc] sm:$0xf]
    %v323 = vld [vmem:[#allocation8 + $0x10] sm:$0xf]
    %v324 = vld [vmem:[#allocation8 + $0x14] sm:$0xf]
    %v325 = vld [vmem:[#allocation8 + $0x18] sm:$0xf]
    %v326 = vld [vmem:[#allocation8 + $0x1c] sm:$0xf]
    %v327 = vld [vmem:[#allocation8 + $0x20] sm:$0xf]
    %v328 = vld [vmem:[#allocation8 + $0x24] sm:$0xf]
    %v329 = vld [vmem:[#allocation8 + $0x28] sm:$0xf]
    %v330 = vld [vmem:[#allocation8 + $0x2c] sm:$0xf]
    %v331 = vld [vmem:[#allocation8 + $0x30] sm:$0xf]
    %v332 = vld [vmem:[#allocation8 + $0x34] sm:$0xf]
    %v333 = vld [vmem:[#allocation8 + $0x38] sm:$0xf]
    %v334 = vld [vmem:[#allocation8 + $0x3c] sm:$0xf]
    %v335 = vld [vmem:[%s6] sm:$0x1]
    %v337 = vlaneseq
    %v338 = vshrl.u32 %v337, 7
    %v339 = vsub.s32 0, %v338
    %v340 = vrot.slane %v335, %v339
    %v358 = vunpack.c.l.b16 %v319
    %v359 = vunpack.c.l.b16 %v320
    %v360 = vunpack.c.l.b16 %v321
    %v361 = vunpack.c.l.b16 %v322
    %v362 = vunpack.c.l.b16 %v323
    %v363 = vunpack.c.l.b16 %v324
    %v364 = vunpack.c.l.b16 %v325
    %v365 = vunpack.c.l.b16 %v326
    %v366 = vunpack.c.l.b16 %v327
    %v367 = vunpack.c.l.b16 %v328
    %v368 = vunpack.c.l.b16 %v329
    %v369 = vunpack.c.l.b16 %v330
    %v370 = vunpack.c.l.b16 %v331
    %v371 = vunpack.c.l.b16 %v332
    %v372 = vunpack.c.l.b16 %v333
    %v373 = vunpack.c.l.b16 %v334
    %v374 = vpack.c.b16 %v359, %v358
    %v375 = vpack.c.b16 %v361, %v360
    %v376 = vpack.c.b16 %v363, %v362
    %v377 = vpack.c.b16 %v365, %v364
    %v378 = vpack.c.b16 %v367, %v366
    %v379 = vpack.c.b16 %v369, %v368
    %v380 = vpack.c.b16 %v371, %v370
    %v381 = vpack.c.b16 %v373, %v372
    %390 = vmatprep.subr.bf16.mxu0 0
    %391 = vmatpush1.bf16.msra.mxu0 %v374
    %392 = vmatprep.subr.bf16.mxu0 0
    %393 = vmatpush1.bf16.msra.mxu0 %v375
    %394 = vmatprep.subr.bf16.mxu0 0
    %395 = vmatpush1.bf16.msra.mxu0 %v376
    %396 = vmatprep.subr.bf16.mxu0 0
    %397 = vmatpush1.bf16.msra.mxu0 %v377
    %398 = vmatprep.subr.bf16.mxu0 0
    %399 = vmatpush1.bf16.msra.mxu0 %v378
    %400 = vmatprep.subr.bf16.mxu0 0
    %401 = vmatpush1.bf16.msra.mxu0 %v379
    %402 = vmatprep.subr.bf16.mxu0 0
    %403 = vmatpush1.bf16.msra.mxu0 %v380
    %404 = vmatprep.subr.bf16.mxu0 0
    %405 = vmatpush1.bf16.msra.mxu0 %v381
    %406 = vmatprep.subr.bf16.mxu0 0
    %407 = vmatpush1.bf16.msra.mxu0 0
    %408 = vmatprep.subr.bf16.mxu0 0
    %409 = vmatpush1.bf16.msra.mxu0 0
    %410 = vmatprep.subr.bf16.mxu0 0
    %411 = vmatpush1.bf16.msra.mxu0 0
    %412 = vmatprep.subr.bf16.mxu0 0
    %413 = vmatpush1.bf16.msra.mxu0 0
    %414 = vmatprep.subr.bf16.mxu0 0
    %415 = vmatpush1.bf16.msra.mxu0 0
    %416 = vmatprep.subr.bf16.mxu0 0
    %417 = vmatpush1.bf16.msra.mxu0 0
    %418 = vmatprep.subr.bf16.mxu0 0
    %419 = vmatpush1.bf16.msra.mxu0 0
    %420 = vmatprep.subr.bf16.mxu0 0
    %421 = vmatpush1.bf16.msra.mxu0 0
    %422 = vmatprep.mubr.bf16.mxu0 0
    %423 = vmatmul.mubr.bf16.gmra.mrb[0].mxu0 %v318
    %v424 = vpop.f32.mrb[0].mxu0
    %v425 = vadd.f32 %v340, %v424
    %v426 = vpop.f32.mrb[0].mxu0
    %v427 = vpop.f32.mrb[0].mxu0
    %v428 = vadd.f32 %v340, %v427
    %v429 = vpop.f32.mrb[0].mxu0
    %430 = vdwg.mxu0
    %v431 = vsub.f32 0.0, %v425
    %v432 = vsub.f32 0.0, %v428
    %v433 = vmul.f32 %v431, 1.442695
    %v434 = vpow.pop %v433
    %v435 = vmul.f32 %v432, 1.442695
    %v436 = vpow.pop %v435
    %v437 = vadd.f32 %v434, 1.0
    %v438 = vadd.f32 %v436, 1.0
    %v439 = vrcp.pop %v437
    %v440 = vrcp.pop %v438
    %v442 = vunpack.c.l.b16 %v318
    %v443 = vunpack.c.h.b16 %v318
    %v444 = vpack.c.b16 %v442, %v442
    %v445 = vpack.c.b16 %v443, %v443
    %448 = vst [vmem:[#allocation11] sm:$0xf] %v444
    %449 = vst [vmem:[#allocation11 + $0x4] sm:$0xf] %v445
    %v450 = vpack.c.bf16 %v440, %v439
    %v452 = vunpack.c.l.b16 %v450
    %v453 = vunpack.c.h.b16 %v450
    %v454 = vpack.c.b16 %v452, %v452
    %v455 = vpack.c.b16 %v453, %v453
    %458 = vst [vmem:[#allocation10] sm:$0xf] %v454
    %459 = vst [vmem:[#allocation10 + $0x4] sm:$0xf] %v455
    // Predicated region
    $region46: #{tpu_custom_call.1} parent=1 // pred_check
      _
    $region47: #{tpu_custom_call.1} parent=1 // pred_check_branch
      %461 = sbr.rel (0) target = $region49
    $region48: #{tpu_custom_call.1} parent=1 // pred_region
      %s463 = ssub.s32 128, 128
      %464 = vsyncadd [#allocation4], %s463
      %s465 = sshll.u32 [#allocation10], 4
      %s466 = int_to_ptr.vmem [resolvable:$true] %s465
      %471 = dma.vmem_to_hbm [thread:$0]  %s466, 128, %s7, [#allocation4], 64, 64, 4
    $region49: #{tpu_custom_call.1} parent=1 // pred_fallthru
      _
    // Predicated region
    $region50: #{tpu_custom_call.1} parent=1 // pred_check
      _
    $region51: #{tpu_custom_call.1} parent=1 // pred_check_branch
      %473 = sbr.rel (0) target = $region53
    $region52: #{tpu_custom_call.1} parent=1 // pred_region
      %s475 = ssub.s32 128, 128
      %476 = vsyncadd [#allocation12], %s475
      %s477 = sshll.u32 [#allocation11], 4
      %s478 = int_to_ptr.vmem [resolvable:$true] %s477
      %483 = dma.vmem_to_hbm [thread:$0]  %s478, 128, %s8, [#allocation12], 64, 64, 4
    $region53: #{tpu_custom_call.1} parent=1 // pred_fallthru
      _
    // Predicated region
    $region54: #{tpu_custom_call.1} parent=1 // pred_check
      _
    $region55: #{tpu_custom_call.1} parent=1 // pred_check_branch
      %485 = sbr.rel (0) target = $region57
    $region56: #{tpu_custom_call.1} parent=1 // pred_region
      %486 = dma.done [#allocation4], 128
    $region57: #{tpu_custom_call.1} parent=1 // pred_fallthru
      _
    // Predicated region
    $region58: #{tpu_custom_call.1} parent=1 // pred_check
      _
    $region59: #{tpu_custom_call.1} parent=1 // pred_check_branch
      %488 = sbr.rel (0) target = $region61
    $region60: #{tpu_custom_call.1} parent=1 // pred_region
      %489 = dma.done [#allocation12], 128
    $region61: #{tpu_custom_call.1} parent=1 // pred_fallthru
      _
    %490 = vsyncpa [#allocation3], 1
    %491 = vsyncpa [#allocation6], 1
    %492 = vsyncpa [#allocation9], 1
    %493 = vsyncpa [#allocation4], 1
    %494 = vsyncpa [#allocation12], 1

</llo_original>
